<compile_context>
chip_gen: v7x
topology: tpu7x:2x2x1
jax: 0.10.0
libtpu: 0.0.40
codegen_flags: <defaults>
</compile_context>

<pallas_src>
import functools

import jax
import jax.numpy as jnp
from jax.experimental import pallas as pl
from jax.experimental.pallas import tpu as pltpu

D_IN = 300    # FastText embedding dim
D_HID = 512   # hidden width for the dim_out_fc < 1500 branch
D_OUT = 256   # dim_out_fc


def _round_up(n, m):
    return ((n + m - 1) // m) * m


def _embed_text_kernel(a_ref, x_ref, w1_ref, b1_ref, w2_ref, b2_ref, o_ref):
    # a_ref : (1,) f32   PReLU parameter, scalar-prefetched into SMEM
    # x_ref : (tb, 300) f32      w1_ref: (300, 512) bf16
    # b1_ref: (1, 512) f32       w2_ref: (512, 256) bf16
    # b2_ref: (1, 256) f32       o_ref : (tb, 256) out dtype

    # ReLU in f32, cast to bf16 only for the MXU feed (f32 accumulation).
    x = jnp.maximum(x_ref[...], jnp.float32(0.0))
    h = jnp.dot(x.astype(jnp.bfloat16), w1_ref[...],
                preferred_element_type=jnp.float32)
    h = h + b1_ref[...]

    # PReLU with a single shared parameter (PyTorch default num_parameters=1).
    a = a_ref[0]
    h = jnp.where(h >= 0, h, a * h)

    # Second Linear; cast h to bf16 only after the (f32) PReLU.
    y = jnp.dot(h.astype(jnp.bfloat16), w2_ref[...],
                preferred_element_type=jnp.float32)
    y = y + b2_ref[...]

    # L2 normalization: y * rsqrt(sum(y^2)).  eps clamp guards an all-zero row
    # (equivalent to y / max(||y||, 1e-12), as F.normalize / the module does).
    ss = jnp.sum(y * y, axis=-1, keepdims=True)
    o_ref[...] = (y * jax.lax.rsqrt(jnp.maximum(ss, jnp.float32(1e-24)))
                  ).astype(o_ref.dtype)


def prepare_params(w1, b1, prelu_a, w2, b2):
    """One-time parameter preparation (call once, reuse for every forward).

    Weights are stored as (in, out) so the kernel computes x @ W directly.
    """
    return (jnp.asarray(w1, jnp.bfloat16),                     # (300, 512)
            jnp.asarray(b1, jnp.float32).reshape(1, D_HID),    # (1, 512)
            jnp.asarray(prelu_a, jnp.float32).reshape(1),      # (1,)
            jnp.asarray(w2, jnp.bfloat16),                     # (512, 256)
            jnp.asarray(b2, jnp.float32).reshape(1, D_OUT))    # (1, 256)


@functools.partial(jax.jit, static_argnames=("tile_b", "out_dtype"))
def embedding_net_text(x, w1_b, b1_r, a_r, w2_b, b2_r, *, tile_b=512,
                       out_dtype=jnp.float32):
    """x: (B, 300) f32; remaining args from prepare_params(). Returns (B, 256)."""
    B, d_in = x.shape
    assert d_in == D_IN

    # Batch tile: large (default 512) to amortize the ~0.35us per-grid-step
    # overhead and fill the MXU, but capped at ceil(B/2) (rounded to the 8-row
    # sublane granule) so there are >= 2 grid steps whenever the batch allows
    # it -- the "parallel" grid axis then shards across both v7x TensorCores.
    tb = min(tile_b, _round_up(max(-(-B // 2), 8), 8))
    grid = (pl.cdiv(B, tb),)   # ragged last block is masked by Pallas

    out_bytes = jnp.dtype(out_dtype).itemsize
    cost = pl.CostEstimate(
        flops=2 * B * (D_IN * D_HID + D_HID * D_OUT),
        transcendentals=B,                                    # one rsqrt per row
        bytes_accessed=(B * (D_IN * 4 + D_OUT * out_bytes)          # x + out
                        + (D_IN * D_HID + D_HID * D_OUT) * 2        # bf16 weights
                        + (D_HID + D_OUT) * 4),                     # biases
    )

    return pl.pallas_call(
        _embed_text_kernel,
        out_shape=jax.ShapeDtypeStruct((B, D_OUT), out_dtype),
        grid_spec=pltpu.PrefetchScalarGridSpec(
            num_scalar_prefetch=1,           # PReLU scalar -> SMEM scalar path
            grid=grid,
            in_specs=[
                pl.BlockSpec((tb, D_IN), lambda i, a: (i, 0)),      # x (native width)
                pl.BlockSpec((D_IN, D_HID), lambda i, a: (0, 0)),   # W1 (invariant)
                pl.BlockSpec((1, D_HID), lambda i, a: (0, 0)),      # b1
                pl.BlockSpec((D_HID, D_OUT), lambda i, a: (0, 0)),  # W2 (invariant)
                pl.BlockSpec((1, D_OUT), lambda i, a: (0, 0)),      # b2
            ],
            out_specs=pl.BlockSpec((tb, D_OUT), lambda i, a: (i, 0)),
        ),
        compiler_params=pltpu.CompilerParams(
            dimension_semantics=("parallel",),   # shards grid over v7x's 2 TCs
            vmem_limit_bytes=32 * 1024 * 1024,
        ),
        cost_estimate=cost,
    )(a_r, x, w1_b, b1_r, w2_b, b2_r)


def _kaiming_uniform(key, fan_in, shape):
    # kaiming_uniform_(mode='fan_in', nonlinearity='relu'): bound = sqrt(6 / fan_in)
    bound = jnp.sqrt(6.0 / fan_in)
    return jax.random.uniform(key, shape, jnp.float32, -bound, bound)


def _reference(x, w1, b1, prelu_a, w2, b2):
    # Pure-JAX reference mirroring the bf16-operand / f32-accumulate matmul math.
    o = jnp.maximum(x, 0.0)
    h = jnp.dot(o.astype(jnp.bfloat16), w1.astype(jnp.bfloat16),
                preferred_element_type=jnp.float32) + b1.reshape(1, -1)
    a = prelu_a.reshape(())
    h = jnp.where(h >= 0, h, a * h)
    y = jnp.dot(h.astype(jnp.bfloat16), w2.astype(jnp.bfloat16),
                preferred_element_type=jnp.float32) + b2.reshape(1, -1)
    ss = jnp.sum(y * y, axis=-1, keepdims=True)
    return y * jax.lax.rsqrt(jnp.maximum(ss, 1e-24))


if __name__ == "__main__":
    key = jax.random.PRNGKey(0)
    kx, k1, kb1, k2, kb2 = jax.random.split(key, 5)

    # Deterministic parameter init (kaiming-uniform weights, small uniform biases).
    w1 = _kaiming_uniform(k1, D_IN, (D_IN, D_HID))
    b1 = jax.random.uniform(kb1, (D_HID,), jnp.float32, -0.05, 0.05)
    w2 = _kaiming_uniform(k2, D_HID, (D_HID, D_OUT))
    b2 = jax.random.uniform(kb2, (D_OUT,), jnp.float32, -0.05, 0.05)
    prelu_a = jnp.full((1,), 0.25, jnp.float32)  # PyTorch PReLU default init

    # One-time parameter prep (bf16 weights etc.), outside the jitted forward.
    params = prepare_params(w1, b1, prelu_a, w2, b2)

    # Small batch, a non-multiple-of-tile batch (exercises ragged-block output
    # masking), and a larger batch exercising the 2-step / 256-row-tile path.
    for B in (16, 50, 512):
        x = jax.random.normal(jax.random.fold_in(kx, B), (B, D_IN), jnp.float32)
        out = jax.block_until_ready(embedding_net_text(x, *params))
        ref = _reference(x, w1, b1, prelu_a, w2, b2)
        assert out.shape == (B, D_OUT)
        assert jnp.allclose(out, ref, atol=2e-4, rtol=2e-4), f"mismatch at B={B}"

    print("KERNEL_OK")
</pallas_src>

<mosaic_0001>
module attributes {stable_mosaic.version = 11 : i64} {
  func.func @_embed_text_kernel(%arg0: i32, %arg1: memref<1xf32, #tpu.memory_space<smem>>, %arg2: memref<8x300xf32, #tpu.memory_space<vmem>>, %arg3: memref<300x512xbf16, #tpu.memory_space<vmem>>, %arg4: memref<1x512xf32, #tpu.memory_space<vmem>>, %arg5: memref<512x256xbf16, #tpu.memory_space<vmem>>, %arg6: memref<1x256xf32, #tpu.memory_space<vmem>>, %arg7: memref<8x256xf32, #tpu.memory_space<vmem>>) attributes {dimension_semantics = [#tpu.dimension_semantics<parallel>], iteration_bounds = array<i64: 2>, scalar_prefetch = 1 : i64, scratch_operands = 0 : i64, tpu.core_type = #tpu.core_type<tc>, window_params = [{transform_indices = @transform_0, window_bounds = array<i64: 8, 300>}, {pipeline_mode = #tpu.pipeline_mode<synchronous>, transform_indices = @transform_1, window_bounds = array<i64: 300, 512>}, {pipeline_mode = #tpu.pipeline_mode<synchronous>, transform_indices = @transform_2, window_bounds = array<i64: 1, 512>}, {pipeline_mode = #tpu.pipeline_mode<synchronous>, transform_indices = @transform_3, window_bounds = array<i64: 512, 256>}, {pipeline_mode = #tpu.pipeline_mode<synchronous>, transform_indices = @transform_4, window_bounds = array<i64: 1, 256>}, {transform_indices = @transform_5, window_bounds = array<i64: 8, 256>}]} {
    %c0 = arith.constant 0 : index
    %c0_0 = arith.constant 0 : index
    %0 = vector.load %arg2[%c0, %c0_0] : memref<8x300xf32, #tpu.memory_space<vmem>>, vector<8x300xf32>
    %cst = arith.constant 0.000000e+00 : f32
    %1 = vector.broadcast %cst : f32 to vector<8x300xf32>
    %2 = arith.maximumf %0, %1 : vector<8x300xf32>
    %3 = arith.truncf %2 : vector<8x300xf32> to vector<8x300xbf16>
    %c0_1 = arith.constant 0 : index
    %c0_2 = arith.constant 0 : index
    %4 = vector.load %arg3[%c0_1, %c0_2] : memref<300x512xbf16, #tpu.memory_space<vmem>>, vector<300x512xbf16>
    %cst_3 = arith.constant dense<0.000000e+00> : vector<8x512xf32>
    %5 = tpu.matmul %3, %4, %cst_3 {dimension_numbers = #tpu.dot_dimension_numbers<[1], [0], [0], [1], [0, 0, 1, 1], [], []>} : vector<8x300xbf16>, vector<300x512xbf16>, vector<8x512xf32> -> vector<8x512xf32>
    %c0_4 = arith.constant 0 : index
    %c0_5 = arith.constant 0 : index
    %6 = vector.load %arg4[%c0_4, %c0_5] : memref<1x512xf32, #tpu.memory_space<vmem>>, vector<1x512xf32>
    %7 = vector.broadcast %6 : vector<1x512xf32> to vector<8x512xf32>
    %8 = arith.addf %5, %7 : vector<8x512xf32>
    %c0_6 = arith.constant 0 : index
    %9 = memref.load %arg1[%c0_6] : memref<1xf32, #tpu.memory_space<smem>>
    %cst_7 = arith.constant 0.000000e+00 : f32
    %10 = vector.broadcast %cst_7 : f32 to vector<8x512xf32>
    %11 = arith.cmpf oge, %8, %10 : vector<8x512xf32>
    %12 = vector.broadcast %9 : f32 to vector<8x512xf32>
    %13 = arith.mulf %12, %8 : vector<8x512xf32>
    %14 = arith.select %11, %8, %13 : vector<8x512xi1>, vector<8x512xf32>
    %15 = arith.truncf %14 : vector<8x512xf32> to vector<8x512xbf16>
    %c0_8 = arith.constant 0 : index
    %c0_9 = arith.constant 0 : index
    %16 = vector.load %arg5[%c0_8, %c0_9] : memref<512x256xbf16, #tpu.memory_space<vmem>>, vector<512x256xbf16>
    %cst_10 = arith.constant dense<0.000000e+00> : vector<8x256xf32>
    %17 = tpu.matmul %15, %16, %cst_10 {dimension_numbers = #tpu.dot_dimension_numbers<[1], [0], [0], [1], [0, 0, 1, 1], [], []>} : vector<8x512xbf16>, vector<512x256xbf16>, vector<8x256xf32> -> vector<8x256xf32>
    %c0_11 = arith.constant 0 : index
    %c0_12 = arith.constant 0 : index
    %18 = vector.load %arg6[%c0_11, %c0_12] : memref<1x256xf32, #tpu.memory_space<vmem>>, vector<1x256xf32>
    %19 = vector.broadcast %18 : vector<1x256xf32> to vector<8x256xf32>
    %20 = arith.addf %17, %19 : vector<8x256xf32>
    %21 = arith.mulf %20, %20 : vector<8x256xf32>
    %cst_13 = arith.constant dense<0.000000e+00> : vector<8xf32>
    %22 = vector.multi_reduction <add>, %21, %cst_13 [1] : vector<8x256xf32> to vector<8xf32>
    %23 = vector.shape_cast %22 : vector<8xf32> to vector<8x1xf32>
    %cst_14 = arith.constant 1.000000e-24 : f32
    %24 = vector.broadcast %cst_14 : f32 to vector<8x1xf32>
    %25 = arith.maximumf %23, %24 : vector<8x1xf32>
    %26 = math.rsqrt %25 : vector<8x1xf32>
    %27 = vector.broadcast %26 : vector<8x1xf32> to vector<8x256xf32>
    %28 = arith.mulf %20, %27 : vector<8x256xf32>
    %c0_15 = arith.constant 0 : index
    %c0_16 = arith.constant 0 : index
    %29 = vector.load %arg7[%c0_15, %c0_16] : memref<8x256xf32, #tpu.memory_space<vmem>>, vector<8x256xf32>
    tpu.vector_store %arg7[%c0_15, %c0_16], %28 {strides = array<i32>} : memref<8x256xf32, #tpu.memory_space<vmem>>, vector<8x256xf32>,
    return
  }
  func.func @transform_0(%arg0: i32, %arg1: memref<1xf32, #tpu.memory_space<smem>>) -> (i32, i32) {
    %c0_i32 = arith.constant 0 : i32
    %c0_i32_0 = arith.constant 0 : i32
    return %arg0, %c0_i32 : i32, i32
  }
  func.func @transform_1(%arg0: i32, %arg1: memref<1xf32, #tpu.memory_space<smem>>) -> (i32, i32) {
    %c0_i32 = arith.constant 0 : i32
    %c0_i32_0 = arith.constant 0 : i32
    %c0_i32_1 = arith.constant 0 : i32
    return %c0_i32, %c0_i32_0 : i32, i32
  }
  func.func @transform_2(%arg0: i32, %arg1: memref<1xf32, #tpu.memory_space<smem>>) -> (i32, i32) {
    %c0_i32 = arith.constant 0 : i32
    %c0_i32_0 = arith.constant 0 : i32
    %c0_i32_1 = arith.constant 0 : i32
    return %c0_i32, %c0_i32_0 : i32, i32
  }
  func.func @transform_3(%arg0: i32, %arg1: memref<1xf32, #tpu.memory_space<smem>>) -> (i32, i32) {
    %c0_i32 = arith.constant 0 : i32
    %c0_i32_0 = arith.constant 0 : i32
    %c0_i32_1 = arith.constant 0 : i32
    return %c0_i32, %c0_i32_0 : i32, i32
  }
  func.func @transform_4(%arg0: i32, %arg1: memref<1xf32, #tpu.memory_space<smem>>) -> (i32, i32) {
    %c0_i32 = arith.constant 0 : i32
    %c0_i32_0 = arith.constant 0 : i32
    %c0_i32_1 = arith.constant 0 : i32
    return %c0_i32, %c0_i32_0 : i32, i32
  }
  func.func @transform_5(%arg0: i32, %arg1: memref<1xf32, #tpu.memory_space<smem>>) -> (i32, i32) {
    %c0_i32 = arith.constant 0 : i32
    %c0_i32_0 = arith.constant 0 : i32
    return %arg0, %c0_i32 : i32, i32
  }
}

</mosaic_0001>

<llo_original>
// kernel: embedding_net_text.1
$region0: #{embedding_net_text.1}
  #allocation0 [shape = 'u32[]', space=smem, size = 0x4, offset = 0x4, fixed_abs, tag = 'smem constant byte address 0x4 - core index']
  #allocation1 [shape = 'u32[144,128]{1,0:T(1,128)}', space=vmem, size = 0x12000, scoped, tag = 'internal scratch']
  #allocation2 [shape = 's32[1]{0}', space=sflag, size = 0x4, scoped, tag = 'scoped memory for embedding_net_text.1']
  #allocation3 [shape = 'f32[1]{0:T(128)S(6)}', space=smem, size = 0x200, scoped, tag = 'prefetched SMEM operand 0']
  %s0 = inlined_call_operand.<no memory space> [shape: f32[1], index: 0, kind: input, shape index: {}]
  %s1 = inlined_call_operand.hbm [shape: f32[16,300], index: 1, kind: input, shape index: {}]
  %s2 = inlined_call_operand.hbm [shape: bf16[300,512], index: 2, kind: input, shape index: {}]
  %s3 = inlined_call_operand.vmem [shape: f32[1,512], index: 3, kind: input, shape index: {}]
  %s4 = inlined_call_operand.hbm [shape: bf16[512,256], index: 4, kind: input, shape index: {}]
  %s5 = inlined_call_operand.vmem [shape: f32[1,256], index: 5, kind: input, shape index: {}]
  %s6 = inlined_call_operand.hbm [shape: f32[16,256], index: 6, kind: output, shape index: {}]
  %s7 = sld [smem:[#allocation0]]
  $region65: #{embedding_net_text.1} parent=0
    _
  %s9 = ssub.s32 1, %s7
  %s10 = scalar_select 0, %s9, %s7
  %11 = sst [smem:[#allocation3]] %s0
  $region1: #{embedding_net_text.1} parent=0
    #allocation4 [shape = 'u8[24576]{0}', space=vmem, size = 0x6000, scoped, tag = 'input window, operand 1']
    #allocation5 [shape = 's32[2]{0}', space=sflag, size = 0x8, scoped, tag = 'scoped memory for embedding_net_text.1']
    #allocation6 [shape = 's32[2]{0}', space=sflag, size = 0x8, scoped, tag = 'scoped memory for embedding_net_text.1']
    #allocation7 [shape = 'u8[311296]{0}', space=vmem, size = 0x4c000, scoped, tag = 'input window, operand 2, single buffered']
    #allocation8 [shape = 's32[1]{0}', space=sflag, size = 0x4, scoped, tag = 'scoped memory for embedding_net_text.1']
    #allocation9 [shape = 'u8[262144]{0}', space=vmem, size = 0x40000, scoped, tag = 'input window, operand 4, single buffered']
    #allocation10 [shape = 'u8[16384]{0}', space=vmem, size = 0x4000, scoped, tag = 'output window, operand 0']
    %12 = vsyncpa [#allocation5], 0
    %s13 = scalar_lea.sflag [#allocation5], 1
    %14 = vsyncpa %s13, 0
    %15 = vsyncpa [#allocation8], 0
    %16 = vsyncpa [#allocation6], 0
    %s17 = scalar_lea.sflag [#allocation6], 1
    %18 = vsyncpa %s17, 0
    loop: start=0, step=1, limit=4
    $region2: #{embedding_net_text.1} parent=1 // loop_pre_header
      _
    $region3: #{embedding_net_text.1} parent=1 // loop_header
      %s20 = sphi 0, %s24
      %p21 = scmp.ge.s32.totalorder %s20, 4
      %s30 = sphi 0, %s32
      %s33 = sphi 0, %s30
      %s34 = sphi 0, %s33
      %s50 = sphi 0, %s34
      %s54 = sphi 0, %s54
      %s56 = sphi 0, %s54
      %s57 = sphi 0, %s56
      %s71 = sphi 0, %s57
      %s75 = sphi 0, %s75
      %s77 = sphi 0, %s75
      %s78 = sphi 0, %s77
      %s92 = sphi 0, %s78
      %s96 = sphi 0, %s96
      %s98 = sphi 0, %s96
      %s99 = sphi 0, %s98
      %s113 = sphi 0, %s99
      %s117 = sphi 0, %s117
      %s119 = sphi 0, %s117
      %s120 = sphi 0, %s119
      %s134 = sphi 0, %s120
      %s140 = sphi 0, %s142
      %s143 = sphi 0, %s140
      %s144 = sphi 0, %s143
      %s160 = sphi 0, %s144
    $region4: #{embedding_net_text.1} parent=1 // loop_header_branch
      %23 = sbr.rel (%p21) target = $region8
    $region5: #{embedding_net_text.1} parent=1 // loop_body
      %s25 = ssub.s32 %s20, 1
      %s26 = ssub.s32 %s20, 2
      %s27 = sadd.s32 %s20, 1
      %s28 = ssub.s32 %s20, %s27
      %p29 = scmp.eq.s32.totalorder %s28, 0
      %s31 = sadd.s32 %s30, 1
      %s32 = scalar_select %p29, %s30, %s31
      %p35 = pneg %p29
      %p36 = scmp.eq.s32.totalorder %s20, 1
      %p37 = por %p35, %p36
      %p38 = scmp.ne.s32.totalorder %s30, %s33
      %p39 = scmp.eq.s32.totalorder %s20, 0
      %p40 = por %p38, %p39
      %p41 = scmp.ne.s32.totalorder %s30, %s33
      %p42 = scmp.eq.s32.totalorder %s25, 1
      %p43 = por %p41, %p42
      %p44 = scmp.ne.s32.totalorder %s33, %s34
      %p45 = scmp.eq.s32.totalorder %s25, 0
      %p46 = por %p44, %p45
      %p47 = scmp.ne.s32.totalorder %s33, %s34
      %p48 = scmp.eq.s32.totalorder %s26, 1
      %p49 = por %p47, %p48
      %p51 = scmp.ne.s32.totalorder %s34, %s50
      %p52 = scmp.eq.s32.totalorder %s26, 0
      %p53 = por %p51, %p52
      %s55 = sadd.s32 %s54, 1
      %p58 = scmp.eq.s32.totalorder %s20, 1
      %p59 = scmp.ne.s32.totalorder %s54, %s56
      %p60 = scmp.eq.s32.totalorder %s20, 0
      %p61 = por %p59, %p60
      %p62 = scmp.ne.s32.totalorder %s54, %s56
      %p63 = scmp.eq.s32.totalorder %s25, 1
      %p64 = por %p62, %p63
      %p65 = scmp.ne.s32.totalorder %s56, %s57
      %p66 = scmp.eq.s32.totalorder %s25, 0
      %p67 = por %p65, %p66
      %p68 = scmp.ne.s32.totalorder %s56, %s57
      %p69 = scmp.eq.s32.totalorder %s26, 1
      %p70 = por %p68, %p69
      %p72 = scmp.ne.s32.totalorder %s57, %s71
      %p73 = scmp.eq.s32.totalorder %s26, 0
      %p74 = por %p72, %p73
      %s76 = sadd.s32 %s75, 1
      %p79 = scmp.eq.s32.totalorder %s20, 1
      %p80 = scmp.ne.s32.totalorder %s75, %s77
      %p81 = scmp.eq.s32.totalorder %s20, 0
      %p82 = por %p80, %p81
      %p83 = scmp.ne.s32.totalorder %s75, %s77
      %p84 = scmp.eq.s32.totalorder %s25, 1
      %p85 = por %p83, %p84
      %p86 = scmp.ne.s32.totalorder %s77, %s78
      %p87 = scmp.eq.s32.totalorder %s25, 0
      %p88 = por %p86, %p87
      %p89 = scmp.ne.s32.totalorder %s77, %s78
      %p90 = scmp.eq.s32.totalorder %s26, 1
      %p91 = por %p89, %p90
      %p93 = scmp.ne.s32.totalorder %s78, %s92
      %p94 = scmp.eq.s32.totalorder %s26, 0
      %p95 = por %p93, %p94
      %s97 = sadd.s32 %s96, 1
      %p100 = scmp.eq.s32.totalorder %s20, 1
      %p101 = scmp.ne.s32.totalorder %s96, %s98
      %p102 = scmp.eq.s32.totalorder %s20, 0
      %p103 = por %p101, %p102
      %p104 = scmp.ne.s32.totalorder %s96, %s98
      %p105 = scmp.eq.s32.totalorder %s25, 1
      %p106 = por %p104, %p105
      %p107 = scmp.ne.s32.totalorder %s98, %s99
      %p108 = scmp.eq.s32.totalorder %s25, 0
      %p109 = por %p107, %p108
      %p110 = scmp.ne.s32.totalorder %s98, %s99
      %p111 = scmp.eq.s32.totalorder %s26, 1
      %p112 = por %p110, %p111
      %p114 = scmp.ne.s32.totalorder %s99, %s113
      %p115 = scmp.eq.s32.totalorder %s26, 0
      %p116 = por %p114, %p115
      %s118 = sadd.s32 %s117, 1
      %p121 = scmp.eq.s32.totalorder %s20, 1
      %p122 = scmp.ne.s32.totalorder %s117, %s119
      %p123 = scmp.eq.s32.totalorder %s20, 0
      %p124 = por %p122, %p123
      %p125 = scmp.ne.s32.totalorder %s117, %s119
      %p126 = scmp.eq.s32.totalorder %s25, 1
      %p127 = por %p125, %p126
      %p128 = scmp.ne.s32.totalorder %s119, %s120
      %p129 = scmp.eq.s32.totalorder %s25, 0
      %p130 = por %p128, %p129
      %p131 = scmp.ne.s32.totalorder %s119, %s120
      %p132 = scmp.eq.s32.totalorder %s26, 1
      %p133 = por %p131, %p132
      %p135 = scmp.ne.s32.totalorder %s120, %s134
      %p136 = scmp.eq.s32.totalorder %s26, 0
      %p137 = por %p135, %p136
      %s138 = ssub.s32 %s20, %s27
      %p139 = scmp.eq.s32.totalorder %s138, 0
      %s141 = sadd.s32 %s140, 1
      %s142 = scalar_select %p139, %s140, %s141
      %p145 = pneg %p139
      %p146 = scmp.eq.s32.totalorder %s20, 1
      %p147 = por %p145, %p146
      %p148 = scmp.ne.s32.totalorder %s140, %s143
      %p149 = scmp.eq.s32.totalorder %s20, 0
      %p150 = por %p148, %p149
      %p151 = scmp.ne.s32.totalorder %s140, %s143
      %p152 = scmp.eq.s32.totalorder %s25, 1
      %p153 = por %p151, %p152
      %p154 = scmp.ne.s32.totalorder %s143, %s144
      %p155 = scmp.eq.s32.totalorder %s25, 0
      %p156 = por %p154, %p155
      %p157 = scmp.ne.s32.totalorder %s143, %s144
      %p158 = scmp.eq.s32.totalorder %s26, 1
      %p159 = por %p157, %p158
      %p161 = scmp.ne.s32.totalorder %s144, %s160
      %p162 = scmp.eq.s32.totalorder %s26, 0
      %p163 = por %p161, %p162
      %p164 = scmp.le.s32.totalorder 1, %s20
      %p165 = scmp.lt.s32.totalorder %s20, 3
      %p166 = pnand %p164, %p165
      %p167 = pneg %p166
      // Predicated region
      $region9: #{embedding_net_text.1} parent=5 // pred_check
        _
      $region10: #{embedding_net_text.1} parent=5 // pred_check_branch
        %169 = sbr.rel (%p166) target = $region12
      $region11: #{embedding_net_text.1} parent=5 // pred_region
        %s170 = ssub.s32 %s20, 1
        // Predicated region
        $region13: #{embedding_net_text.1} parent=11 // pred_check
          %p171 = pneg %p67
        $region14: #{embedding_net_text.1} parent=11 // pred_check_branch
          %173 = sbr.rel (%p171) target = $region16
        $region15: #{embedding_net_text.1} parent=11 // pred_region
          %s175 = ssub.s32 9728, 9728
          %176 = vsyncadd [#allocation8], %s175
          %s177 = sshll.u32 [#allocation7], 4
          %s178 = int_to_ptr.vmem [resolvable:$true] %s177
          %183 = dma.hbm_to_vmem [thread:$0]  %s2, 9728, %s178, [#allocation8], 256, 256, 16
        $region16: #{embedding_net_text.1} parent=11 // pred_fallthru
          _
        // Predicated region
        $region17: #{embedding_net_text.1} parent=11 // pred_check
          %p184 = pneg %p88
        $region18: #{embedding_net_text.1} parent=11 // pred_check_branch
          %186 = sbr.rel (%p184) target = $region20
        $region19: #{embedding_net_text.1} parent=11 // pred_region
          _
        $region20: #{embedding_net_text.1} parent=11 // pred_fallthru
          _
        // Predicated region
        $region21: #{embedding_net_text.1} parent=11 // pred_check
          %p187 = pneg %p109
        $region22: #{embedding_net_text.1} parent=11 // pred_check_branch
          %189 = sbr.rel (%p187) target = $region24
        $region23: #{embedding_net_text.1} parent=11 // pred_region
          %s191 = ssub.s32 8192, 8192
          %192 = vsyncadd [#allocation8], %s191
          %s193 = sshll.u32 [#allocation9], 4
          %s194 = int_to_ptr.vmem [resolvable:$true] %s193
          %199 = dma.hbm_to_vmem [thread:$0]  %s4, 8192, %s194, [#allocation8], 128, 128, 8
        $region24: #{embedding_net_text.1} parent=11 // pred_fallthru
          _
        // Predicated region
        $region25: #{embedding_net_text.1} parent=11 // pred_check
          %p200 = pneg %p130
        $region26: #{embedding_net_text.1} parent=11 // pred_check_branch
          %202 = sbr.rel (%p200) target = $region28
        $region27: #{embedding_net_text.1} parent=11 // pred_region
          _
        $region28: #{embedding_net_text.1} parent=11 // pred_fallthru
          _
      $region12: #{embedding_net_text.1} parent=5 // pred_fallthru
        _
      %p203 = scmp.lt.s32.totalorder %s20, 2
      // Predicated region
      $region29: #{embedding_net_text.1} parent=5 // pred_check
        %p204 = pneg %p203
      $region30: #{embedding_net_text.1} parent=5 // pred_check_branch
        %206 = sbr.rel (%p204) target = $region32
      $region31: #{embedding_net_text.1} parent=5 // pred_region
        // Predicated region
        $region33: #{embedding_net_text.1} parent=31 // pred_check
          %p207 = pneg %p40
        $region34: #{embedding_net_text.1} parent=31 // pred_check_branch
          %209 = sbr.rel (%p207) target = $region36
        $region35: #{embedding_net_text.1} parent=31 // pred_region
          %s210 = sand.u32 %s30, 1
          %s211 = scalar_lea.sflag [#allocation5], %s210
          %s212 = sand.u32 %s30, 1
          %s213 = smul.addr %s212, 24
          %s214 = scalar_lea.vmem [#allocation4], %s213
          %s216 = ssub.s32 384, 384
          %217 = vsyncadd %s211, %s216
          %s218 = smul.addr %s20, 3
          %s219 = smul.addr %s218, 128
          %s220 = scalar_lea.hbm %s1, %s219
          %s222 = sshll.u32 %s214, 4
          %s223 = int_to_ptr.vmem [resolvable:$true] %s222
          %225 = dma.hbm_to_vmem [thread:$0]  %s220, 384, %s223, %s211
        $region36: #{embedding_net_text.1} parent=31 // pred_fallthru
          _
      $region32: #{embedding_net_text.1} parent=5 // pred_fallthru
        _
      %p226 = scmp.le.s32.totalorder 1, %s20
      %p227 = scmp.lt.s32.totalorder %s20, 3
      %p228 = pnand %p226, %p227
      %p229 = pneg %p228
      // Predicated region
      $region37: #{embedding_net_text.1} parent=5 // pred_check
        _
      $region38: #{embedding_net_text.1} parent=5 // pred_check_branch
        %231 = sbr.rel (%p228) target = $region40
      $region39: #{embedding_net_text.1} parent=5 // pred_region
        %s232 = ssub.s32 %s20, 1
        %s233 = sand.u32 %s33, 1
        %s234 = scalar_lea.sflag [#allocation5], %s233
        %s235 = sand.u32 %s33, 1
        %s236 = smul.addr %s235, 24
        %s237 = scalar_lea.vmem [#allocation4], %s236
        // Predicated region
        $region41: #{embedding_net_text.1} parent=39 // pred_check
          %p238 = pneg %p46
        $region42: #{embedding_net_text.1} parent=39 // pred_check_branch
          %240 = sbr.rel (%p238) target = $region44
        $region43: #{embedding_net_text.1} parent=39 // pred_region
          %241 = dma.done %s234, 384
        $region44: #{embedding_net_text.1} parent=39 // pred_fallthru
          _
        // Predicated region
        $region45: #{embedding_net_text.1} parent=39 // pred_check
          %p242 = pneg %p67
        $region46: #{embedding_net_text.1} parent=39 // pred_check_branch
          %244 = sbr.rel (%p242) target = $region48
        $region47: #{embedding_net_text.1} parent=39 // pred_region
          %245 = dma.done [#allocation8], 9728
        $region48: #{embedding_net_text.1} parent=39 // pred_fallthru
          _
        // Predicated region
        $region49: #{embedding_net_text.1} parent=39 // pred_check
          %p246 = pneg %p109
        $region50: #{embedding_net_text.1} parent=39 // pred_check_branch
          %248 = sbr.rel (%p246) target = $region52
        $region51: #{embedding_net_text.1} parent=39 // pred_region
          %249 = dma.done [#allocation8], 8192
        $region52: #{embedding_net_text.1} parent=39 // pred_fallthru
          _
        %s250 = sand.u32 %s33, 1
        %s251 = scalar_lea.sflag [#allocation5], %s250
        %s252 = sand.u32 %s33, 1
        %s253 = smul.addr %s252, 24
        %s254 = scalar_lea.vmem [#allocation4], %s253
        %p255 = pneg %p46
        %p256 = pneg %p43
        %p257 = pneg %p67
        %p258 = pneg %p64
        %p259 = pneg %p88
        %p260 = pneg %p85
        %p261 = pneg %p109
        %p262 = pneg %p106
        %p263 = pneg %p130
        %p264 = pneg %p127
        %p265 = pneg %p156
        %p266 = pneg %p153
        %s267 = sand.u32 %s143, 1
        %s268 = scalar_lea.sflag [#allocation6], %s267
        %s269 = sand.u32 %s143, 1
        %s270 = smul.addr %s269, 16
        %s271 = scalar_lea.vmem [#allocation10], %s270
        %v273 = vld [vmem:[%s237] sm:$0xff]
        %v274 = vld [vmem:[%s237 + $0x8] sm:$0xff]
        %v275 = vld [vmem:[%s237 + $0x10] sm:$0xff]
        %v276 = vmax.f32 %v273, 0.0
        %v277 = vmax.f32 %v274, 0.0
        %v278 = vmax.f32 %v275, 0.0
        %v279 = vpack.c.bf16 %v276, %v276
        %v280 = vpack.c.bf16 %v277, %v277
        %v281 = vpack.c.bf16 %v278, %v278
        %v282 = vld [vmem:[#allocation7] sm:$0xff]
        %v283 = vld [vmem:[#allocation7 + $0x8] sm:$0xff]
        %v284 = vld [vmem:[#allocation7 + $0x10] sm:$0xff]
        %v285 = vld [vmem:[#allocation7 + $0x18] sm:$0xff]
        %v286 = vld [vmem:[#allocation7 + $0x20] sm:$0xff]
        %v287 = vld [vmem:[#allocation7 + $0x28] sm:$0xff]
        %v288 = vld [vmem:[#allocation7 + $0x30] sm:$0xff]
        %v289 = vld [vmem:[#allocation7 + $0x38] sm:$0xff]
        %v290 = vld [vmem:[#allocation7 + $0x40] sm:$0xff]
        %v291 = vld [vmem:[#allocation7 + $0x48] sm:$0xff]
        %v292 = vld [vmem:[#allocation7 + $0x50] sm:$0xff]
        %v293 = vld [vmem:[#allocation7 + $0x58] sm:$0xff]
        %v294 = vld [vmem:[#allocation7 + $0x60] sm:$0xff]
        %v295 = vld [vmem:[#allocation7 + $0x68] sm:$0xff]
        %v296 = vld [vmem:[#allocation7 + $0x70] sm:$0xff]
        %v297 = vld [vmem:[#allocation7 + $0x78] sm:$0xff]
        %v298 = vld [vmem:[#allocation7 + $0x80] sm:$0xff]
        %v299 = vld [vmem:[#allocation7 + $0x88] sm:$0xff]
        %v300 = vld [vmem:[#allocation7 + $0x90] sm:$0xff]
        %v301 = vld [vmem:[#allocation7 + $0x98] sm:$0xff]
        %v302 = vld [vmem:[#allocation7 + $0xa0] sm:$0xff]
        %v303 = vld [vmem:[#allocation7 + $0xa8] sm:$0xff]
        %v304 = vld [vmem:[#allocation7 + $0xb0] sm:$0xff]
        %v305 = vld [vmem:[#allocation7 + $0xb8] sm:$0xff]
        %v306 = vld [vmem:[#allocation7 + $0xc0] sm:$0xff]
        %v307 = vld [vmem:[#allocation7 + $0xc8] sm:$0xff]
        %v308 = vld [vmem:[#allocation7 + $0xd0] sm:$0xff]
        %v309 = vld [vmem:[#allocation7 + $0xd8] sm:$0xff]
        %v310 = vld [vmem:[#allocation7 + $0xe0] sm:$0xff]
        %v311 = vld [vmem:[#allocation7 + $0xe8] sm:$0xff]
        %v312 = vld [vmem:[#allocation7 + $0xf0] sm:$0xff]
        %v313 = vld [vmem:[#allocation7 + $0xf8] sm:$0xff]
        %v314 = vld [vmem:[#allocation7 + $0x100] sm:$0xff]
        %v315 = vld [vmem:[#allocation7 + $0x108] sm:$0xff]
        %v316 = vld [vmem:[#allocation7 + $0x110] sm:$0xff]
        %v317 = vld [vmem:[#allocation7 + $0x118] sm:$0xff]
        %v318 = vld [vmem:[#allocation7 + $0x120] sm:$0xff]
        %v319 = vld [vmem:[#allocation7 + $0x128] sm:$0xff]
        %v320 = vld [vmem:[#allocation7 + $0x130] sm:$0xff]
        %v321 = vld [vmem:[#allocation7 + $0x138] sm:$0xff]
        %v322 = vld [vmem:[#allocation7 + $0x140] sm:$0xff]
        %v323 = vld [vmem:[#allocation7 + $0x148] sm:$0xff]
        %v324 = vld [vmem:[#allocation7 + $0x150] sm:$0xff]
        %v325 = vld [vmem:[#allocation7 + $0x158] sm:$0xff]
        %v326 = vld [vmem:[#allocation7 + $0x160] sm:$0xff]
        %v327 = vld [vmem:[#allocation7 + $0x168] sm:$0xff]
        %v328 = vld [vmem:[#allocation7 + $0x170] sm:$0xff]
        %v329 = vld [vmem:[#allocation7 + $0x178] sm:$0xff]
        %v330 = vld [vmem:[#allocation7 + $0x180] sm:$0xff]
        %v331 = vld [vmem:[#allocation7 + $0x188] sm:$0xff]
        %v332 = vld [vmem:[#allocation7 + $0x190] sm:$0xff]
        %v333 = vld [vmem:[#allocation7 + $0x198] sm:$0xff]
        %v334 = vld [vmem:[#allocation7 + $0x1a0] sm:$0xff]
        %v335 = vld [vmem:[#allocation7 + $0x1a8] sm:$0xff]
        %v336 = vld [vmem:[#allocation7 + $0x1b0] sm:$0xff]
        %v337 = vld [vmem:[#allocation7 + $0x1b8] sm:$0xff]
        %v338 = vld [vmem:[#allocation7 + $0x1c0] sm:$0xff]
        %v339 = vld [vmem:[#allocation7 + $0x1c8] sm:$0xff]
        %v340 = vld [vmem:[#allocation7 + $0x1d0] sm:$0xff]
        %v341 = vld [vmem:[#allocation7 + $0x1d8] sm:$0xff]
        %v342 = vld [vmem:[#allocation7 + $0x1e0] sm:$0xff]
        %v343 = vld [vmem:[#allocation7 + $0x1e8] sm:$0xff]
        %v344 = vld [vmem:[#allocation7 + $0x1f0] sm:$0xff]
        %v345 = vld [vmem:[#allocation7 + $0x1f8] sm:$0xff]
        %v346 = vld [vmem:[#allocation7 + $0x200] sm:$0xff]
        %v347 = vld [vmem:[#allocation7 + $0x208] sm:$0xff]
        %v348 = vld [vmem:[#allocation7 + $0x210] sm:$0xff]
        %v349 = vld [vmem:[#allocation7 + $0x218] sm:$0xff]
        %v350 = vld [vmem:[#allocation7 + $0x220] sm:$0xff]
        %v351 = vld [vmem:[#allocation7 + $0x228] sm:$0xff]
        %v352 = vld [vmem:[#allocation7 + $0x230] sm:$0xff]
        %v353 = vld [vmem:[#allocation7 + $0x238] sm:$0xff]
        %v354 = vld [vmem:[#allocation7 + $0x240] sm:$0xff]
        %v355 = vld [vmem:[#allocation7 + $0x248] sm:$0xff]
        %v356 = vld [vmem:[#allocation7 + $0x250] sm:$0x33]
        %v357 = vld [vmem:[#allocation7 + $0x258] sm:$0x33]
        %v358 = vld [vmem:[%s3] sm:$0xf]
        %v360 = vlaneseq
        %v361 = vshrl.u32 %v360, 7
        %v362 = vsub.s32 0, %v361
        %v363 = vrot.slane %v358, %v362
        %v364 = vlaneseq
        %v365 = vshrl.u32 %v364, 7
        %v366 = vsub.s32 1, %v365
        %v367 = vrot.slane %v358, %v366
        %v368 = vlaneseq
        %v369 = vshrl.u32 %v368, 7
        %v370 = vsub.s32 2, %v369
        %v371 = vrot.slane %v358, %v370
        %v372 = vlaneseq
        %v373 = vshrl.u32 %v372, 7
        %v374 = vsub.s32 3, %v373
        %v375 = vrot.slane %v358, %v374
        %v456 = vunpack.c.l.b16 %v282
        %v457 = vunpack.c.h.b16 %v282
        %v458 = vunpack.c.l.b16 %v283
        %v459 = vunpack.c.h.b16 %v283
        %v460 = vunpack.c.l.b16 %v284
        %v461 = vunpack.c.h.b16 %v284
        %v462 = vunpack.c.l.b16 %v285
        %v463 = vunpack.c.h.b16 %v285
        %v464 = vunpack.c.l.b16 %v286
        %v465 = vunpack.c.h.b16 %v286
        %v466 = vunpack.c.l.b16 %v287
        %v467 = vunpack.c.h.b16 %v287
        %v468 = vunpack.c.l.b16 %v288
        %v469 = vunpack.c.h.b16 %v288
        %v470 = vunpack.c.l.b16 %v289
        %v471 = vunpack.c.h.b16 %v289
        %v472 = vunpack.c.l.b16 %v290
        %v473 = vunpack.c.h.b16 %v290
        %v474 = vunpack.c.l.b16 %v291
        %v475 = vunpack.c.h.b16 %v291
        %v476 = vunpack.c.l.b16 %v292
        %v477 = vunpack.c.h.b16 %v292
        %v478 = vunpack.c.l.b16 %v293
        %v479 = vunpack.c.h.b16 %v293
        %v480 = vunpack.c.l.b16 %v294
        %v481 = vunpack.c.h.b16 %v294
        %v482 = vunpack.c.l.b16 %v295
        %v483 = vunpack.c.h.b16 %v295
        %v484 = vunpack.c.l.b16 %v296
        %v485 = vunpack.c.h.b16 %v296
        %v486 = vunpack.c.l.b16 %v297
        %v487 = vunpack.c.h.b16 %v297
        %v488 = vunpack.c.l.b16 %v298
        %v489 = vunpack.c.h.b16 %v298
        %v490 = vunpack.c.l.b16 %v299
        %v491 = vunpack.c.h.b16 %v299
        %v492 = vunpack.c.l.b16 %v300
        %v493 = vunpack.c.h.b16 %v300
        %v494 = vunpack.c.l.b16 %v301
        %v495 = vunpack.c.h.b16 %v301
        %v496 = vunpack.c.l.b16 %v302
        %v497 = vunpack.c.h.b16 %v302
        %v498 = vunpack.c.l.b16 %v303
        %v499 = vunpack.c.h.b16 %v303
        %v500 = vunpack.c.l.b16 %v304
        %v501 = vunpack.c.h.b16 %v304
        %v502 = vunpack.c.l.b16 %v305
        %v503 = vunpack.c.h.b16 %v305
        %v504 = vunpack.c.l.b16 %v306
        %v505 = vunpack.c.h.b16 %v306
        %v506 = vunpack.c.l.b16 %v307
        %v507 = vunpack.c.h.b16 %v307
        %v508 = vunpack.c.l.b16 %v308
        %v509 = vunpack.c.h.b16 %v308
        %v510 = vunpack.c.l.b16 %v309
        %v511 = vunpack.c.h.b16 %v309
        %v512 = vunpack.c.l.b16 %v310
        %v513 = vunpack.c.h.b16 %v310
        %v514 = vunpack.c.l.b16 %v311
        %v515 = vunpack.c.h.b16 %v311
        %v516 = vunpack.c.l.b16 %v312
        %v517 = vunpack.c.h.b16 %v312
        %v518 = vunpack.c.l.b16 %v313
        %v519 = vunpack.c.h.b16 %v313
        %v520 = vunpack.c.l.b16 %v314
        %v521 = vunpack.c.h.b16 %v314
        %v522 = vunpack.c.l.b16 %v315
        %v523 = vunpack.c.h.b16 %v315
        %v524 = vunpack.c.l.b16 %v316
        %v525 = vunpack.c.h.b16 %v316
        %v526 = vunpack.c.l.b16 %v317
        %v527 = vunpack.c.h.b16 %v317
        %v528 = vunpack.c.l.b16 %v318
        %v529 = vunpack.c.h.b16 %v318
        %v530 = vunpack.c.l.b16 %v319
        %v531 = vunpack.c.h.b16 %v319
        %v532 = vunpack.c.l.b16 %v320
        %v533 = vunpack.c.h.b16 %v320
        %v534 = vunpack.c.l.b16 %v321
        %v535 = vunpack.c.h.b16 %v321
        %v536 = vunpack.c.l.b16 %v322
        %v537 = vunpack.c.h.b16 %v322
        %v538 = vunpack.c.l.b16 %v323
        %v539 = vunpack.c.h.b16 %v323
        %v540 = vunpack.c.l.b16 %v324
        %v541 = vunpack.c.h.b16 %v324
        %v542 = vunpack.c.l.b16 %v325
        %v543 = vunpack.c.h.b16 %v325
        %v544 = vunpack.c.l.b16 %v326
        %v545 = vunpack.c.h.b16 %v326
        %v546 = vunpack.c.l.b16 %v327
        %v547 = vunpack.c.h.b16 %v327
        %v548 = vunpack.c.l.b16 %v328
        %v549 = vunpack.c.h.b16 %v328
        %v550 = vunpack.c.l.b16 %v329
        %v551 = vunpack.c.h.b16 %v329
        %v552 = vunpack.c.l.b16 %v330
        %v553 = vunpack.c.h.b16 %v330
        %v554 = vunpack.c.l.b16 %v331
        %v555 = vunpack.c.h.b16 %v331
        %v556 = vunpack.c.l.b16 %v332
        %v557 = vunpack.c.h.b16 %v332
        %v558 = vunpack.c.l.b16 %v333
        %v559 = vunpack.c.h.b16 %v333
        %v560 = vunpack.c.l.b16 %v334
        %v561 = vunpack.c.h.b16 %v334
        %v562 = vunpack.c.l.b16 %v335
        %v563 = vunpack.c.h.b16 %v335
        %v564 = vunpack.c.l.b16 %v336
        %v565 = vunpack.c.h.b16 %v336
        %v566 = vunpack.c.l.b16 %v337
        %v567 = vunpack.c.h.b16 %v337
        %v568 = vunpack.c.l.b16 %v338
        %v569 = vunpack.c.h.b16 %v338
        %v570 = vunpack.c.l.b16 %v339
        %v571 = vunpack.c.h.b16 %v339
        %v572 = vunpack.c.l.b16 %v340
        %v573 = vunpack.c.h.b16 %v340
        %v574 = vunpack.c.l.b16 %v341
        %v575 = vunpack.c.h.b16 %v341
        %v576 = vunpack.c.l.b16 %v342
        %v577 = vunpack.c.h.b16 %v342
        %v578 = vunpack.c.l.b16 %v343
        %v579 = vunpack.c.h.b16 %v343
        %v580 = vunpack.c.l.b16 %v344
        %v581 = vunpack.c.h.b16 %v344
        %v582 = vunpack.c.l.b16 %v345
        %v583 = vunpack.c.h.b16 %v345
        %v584 = vunpack.c.l.b16 %v346
        %v585 = vunpack.c.h.b16 %v346
        %v586 = vunpack.c.l.b16 %v347
        %v587 = vunpack.c.h.b16 %v347
        %v588 = vunpack.c.l.b16 %v348
        %v589 = vunpack.c.h.b16 %v348
        %v590 = vunpack.c.l.b16 %v349
        %v591 = vunpack.c.h.b16 %v349
        %v592 = vunpack.c.l.b16 %v350
        %v593 = vunpack.c.h.b16 %v350
        %v594 = vunpack.c.l.b16 %v351
        %v595 = vunpack.c.h.b16 %v351
        %v596 = vunpack.c.l.b16 %v352
        %v597 = vunpack.c.h.b16 %v352
        %v598 = vunpack.c.l.b16 %v353
        %v599 = vunpack.c.h.b16 %v353
        %v600 = vunpack.c.l.b16 %v354
        %v601 = vunpack.c.h.b16 %v354
        %v602 = vunpack.c.l.b16 %v355
        %v603 = vunpack.c.h.b16 %v355
        %v604 = vunpack.c.l.b16 %v356
        %v605 = vunpack.c.h.b16 %v356
        %v606 = vunpack.c.l.b16 %v357
        %v607 = vunpack.c.h.b16 %v357
        %v608 = vpack.c.b16 %v460, %v456
        %v609 = vpack.c.b16 %v461, %v457
        %v610 = vpack.c.b16 %v462, %v458
        %v611 = vpack.c.b16 %v463, %v459
        %v612 = vpack.c.b16 %v468, %v464
        %v613 = vpack.c.b16 %v469, %v465
        %v614 = vpack.c.b16 %v470, %v466
        %v615 = vpack.c.b16 %v471, %v467
        %v616 = vpack.c.b16 %v476, %v472
        %v617 = vpack.c.b16 %v477, %v473
        %v618 = vpack.c.b16 %v478, %v474
        %v619 = vpack.c.b16 %v479, %v475
        %v620 = vpack.c.b16 %v484, %v480
        %v621 = vpack.c.b16 %v485, %v481
        %v622 = vpack.c.b16 %v486, %v482
        %v623 = vpack.c.b16 %v487, %v483
        %v624 = vpack.c.b16 %v492, %v488
        %v625 = vpack.c.b16 %v493, %v489
        %v626 = vpack.c.b16 %v494, %v490
        %v627 = vpack.c.b16 %v495, %v491
        %v628 = vpack.c.b16 %v500, %v496
        %v629 = vpack.c.b16 %v501, %v497
        %v630 = vpack.c.b16 %v502, %v498
        %v631 = vpack.c.b16 %v503, %v499
        %v632 = vpack.c.b16 %v508, %v504
        %v633 = vpack.c.b16 %v509, %v505
        %v634 = vpack.c.b16 %v510, %v506
        %v635 = vpack.c.b16 %v511, %v507
        %v636 = vpack.c.b16 %v516, %v512
        %v637 = vpack.c.b16 %v517, %v513
        %v638 = vpack.c.b16 %v518, %v514
        %v639 = vpack.c.b16 %v519, %v515
        %v640 = vpack.c.b16 %v524, %v520
        %v641 = vpack.c.b16 %v525, %v521
        %v642 = vpack.c.b16 %v526, %v522
        %v643 = vpack.c.b16 %v527, %v523
        %v644 = vpack.c.b16 %v532, %v528
        %v645 = vpack.c.b16 %v533, %v529
        %v646 = vpack.c.b16 %v534, %v530
        %v647 = vpack.c.b16 %v535, %v531
        %v648 = vpack.c.b16 %v540, %v536
        %v649 = vpack.c.b16 %v541, %v537
        %v650 = vpack.c.b16 %v542, %v538
        %v651 = vpack.c.b16 %v543, %v539
        %v652 = vpack.c.b16 %v548, %v544
        %v653 = vpack.c.b16 %v549, %v545
        %v654 = vpack.c.b16 %v550, %v546
        %v655 = vpack.c.b16 %v551, %v547
        %v656 = vpack.c.b16 %v556, %v552
        %v657 = vpack.c.b16 %v557, %v553
        %v658 = vpack.c.b16 %v558, %v554
        %v659 = vpack.c.b16 %v559, %v555
        %v660 = vpack.c.b16 %v564, %v560
        %v661 = vpack.c.b16 %v565, %v561
        %v662 = vpack.c.b16 %v566, %v562
        %v663 = vpack.c.b16 %v567, %v563
        %v664 = vpack.c.b16 %v572, %v568
        %v665 = vpack.c.b16 %v573, %v569
        %v666 = vpack.c.b16 %v574, %v570
        %v667 = vpack.c.b16 %v575, %v571
        %v668 = vpack.c.b16 %v580, %v576
        %v669 = vpack.c.b16 %v581, %v577
        %v670 = vpack.c.b16 %v582, %v578
        %v671 = vpack.c.b16 %v583, %v579
        %v672 = vpack.c.b16 %v588, %v584
        %v673 = vpack.c.b16 %v589, %v585
        %v674 = vpack.c.b16 %v590, %v586
        %v675 = vpack.c.b16 %v591, %v587
        %v676 = vpack.c.b16 %v596, %v592
        %v677 = vpack.c.b16 %v597, %v593
        %v678 = vpack.c.b16 %v598, %v594
        %v679 = vpack.c.b16 %v599, %v595
        %v680 = vpack.c.b16 %v604, %v600
        %v681 = vpack.c.b16 %v605, %v601
        %v682 = vpack.c.b16 %v606, %v602
        %v683 = vpack.c.b16 %v607, %v603
        %vm756 = vcmask 359424
        %v758 = vsel %vm756, %v281, 0
        %vm760 = vcmask 1045504
        %v762 = vsel %vm760, %v680, 0
        %v765 = vsel %vm760, %v681, 0
        %v768 = vsel %vm760, %v682, 0
        %v771 = vsel %vm760, %v683, 0
        %773 = vmatprep.subr.bf16.mxu0 %v609
        %774 = vmatpush1.bf16.msra.mxu0 %v608
        %775 = vmatprep.subr.bf16.mxu0 %v613
        %776 = vmatpush1.bf16.msra.mxu0 %v612
        %777 = vmatprep.subr.bf16.mxu0 %v617
        %778 = vmatpush1.bf16.msra.mxu0 %v616
        %779 = vmatprep.subr.bf16.mxu0 %v621
        %780 = vmatpush1.bf16.msra.mxu0 %v620
        %781 = vmatprep.subr.bf16.mxu0 %v625
        %782 = vmatpush1.bf16.msra.mxu0 %v624
        %783 = vmatprep.subr.bf16.mxu0 %v629
        %784 = vmatpush1.bf16.msra.mxu0 %v628
        %785 = vmatprep.subr.bf16.mxu0 %v633
        %786 = vmatpush1.bf16.msra.mxu0 %v632
        %787 = vmatprep.subr.bf16.mxu0 %v637
        %788 = vmatpush1.bf16.msra.mxu0 %v636
        %789 = vmatprep.subr.bf16.mxu0 %v641
        %790 = vmatpush1.bf16.msra.mxu0 %v640
        %791 = vmatprep.subr.bf16.mxu0 %v645
        %792 = vmatpush1.bf16.msra.mxu0 %v644
        %793 = vmatprep.subr.bf16.mxu0 %v649
        %794 = vmatpush1.bf16.msra.mxu0 %v648
        %795 = vmatprep.subr.bf16.mxu0 %v653
        %796 = vmatpush1.bf16.msra.mxu0 %v652
        %797 = vmatprep.subr.bf16.mxu0 %v657
        %798 = vmatpush1.bf16.msra.mxu0 %v656
        %799 = vmatprep.subr.bf16.mxu0 %v661
        %800 = vmatpush1.bf16.msra.mxu0 %v660
        %801 = vmatprep.subr.bf16.mxu0 %v665
        %802 = vmatpush1.bf16.msra.mxu0 %v664
        %803 = vmatprep.subr.bf16.mxu0 %v669
        %804 = vmatpush1.bf16.msra.mxu0 %v668
        %805 = vmatprep.mubr.bf16.mxu0 %v280
        %806 = vmatmul.mubr.bf16.gmra.mrb[0].mxu0 %v279
        %v807 = vpop.f32.mrb[0].mxu0
        %v808 = vadd.f32 %v363, %v807
        %v809 = vpop.f32.mrb[0].mxu0
        %v810 = vadd.f32 %v367, %v809
        %v811 = vpop.f32.mrb[0].mxu0
        %v812 = vpop.f32.mrb[0].mxu0
        %813 = vdwg.mxu0
        %814 = vmatprep.subr.bf16.mxu0 %v673
        %815 = vmatpush1.bf16.msra.mxu0 %v672
        %816 = vmatprep.subr.bf16.mxu0 %v677
        %817 = vmatpush1.bf16.msra.mxu0 %v676
        %818 = vmatprep.subr.bf16.mxu0 %v765
        %819 = vmatpush1.bf16.msra.mxu0 %v762
        %820 = vmatprep.subr.bf16.mxu0 0
        %821 = vmatpush1.bf16.msra.mxu0 0
        %822 = vmatprep.subr.bf16.mxu0 0
        %823 = vmatpush1.bf16.msra.mxu0 0
        %824 = vmatprep.subr.bf16.mxu0 0
        %825 = vmatpush1.bf16.msra.mxu0 0
        %826 = vmatprep.subr.bf16.mxu0 0
        %827 = vmatpush1.bf16.msra.mxu0 0
        %828 = vmatprep.subr.bf16.mxu0 0
        %829 = vmatpush1.bf16.msra.mxu0 0
        %830 = vmatprep.subr.bf16.mxu0 0
        %831 = vmatpush1.bf16.msra.mxu0 0
        %832 = vmatprep.subr.bf16.mxu0 0
        %833 = vmatpush1.bf16.msra.mxu0 0
        %834 = vmatprep.subr.bf16.mxu0 0
        %835 = vmatpush1.bf16.msra.mxu0 0
        %836 = vmatprep.subr.bf16.mxu0 0
        %837 = vmatpush1.bf16.msra.mxu0 0
        %838 = vmatprep.subr.bf16.mxu0 0
        %839 = vmatpush1.bf16.msra.mxu0 0
        %840 = vmatprep.subr.bf16.mxu0 0
        %841 = vmatpush1.bf16.msra.mxu0 0
        %842 = vmatprep.subr.bf16.mxu0 0
        %843 = vmatpush1.bf16.msra.mxu0 0
        %844 = vmatprep.subr.bf16.mxu0 0
        %845 = vmatpush1.bf16.msra.mxu0 0
        %846 = vmatprep.mubr.bf16.mxu0 0
        %847 = vmatmul.mubr.bf16.gmra.mrb[0].mxu0 %v758
        %v848 = vpop.f32.mrb[0].mxu0
        %v849 = vadd.f32 %v808, %v848
        %v850 = vpop.f32.mrb[0].mxu0
        %v851 = vadd.f32 %v810, %v850
        %v852 = vpop.f32.mrb[0].mxu0
        %v853 = vpop.f32.mrb[0].mxu0
        %854 = vdwg.mxu0
        %855 = vmatprep.subr.bf16.mxu0 %v611
        %856 = vmatpush1.bf16.msra.mxu0 %v610
        %857 = vmatprep.subr.bf16.mxu0 %v615
        %858 = vmatpush1.bf16.msra.mxu0 %v614
        %859 = vmatprep.subr.bf16.mxu0 %v619
        %860 = vmatpush1.bf16.msra.mxu0 %v618
        %861 = vmatprep.subr.bf16.mxu0 %v623
        %862 = vmatpush1.bf16.msra.mxu0 %v622
        %863 = vmatprep.subr.bf16.mxu0 %v627
        %864 = vmatpush1.bf16.msra.mxu0 %v626
        %865 = vmatprep.subr.bf16.mxu0 %v631
        %866 = vmatpush1.bf16.msra.mxu0 %v630
        %867 = vmatprep.subr.bf16.mxu0 %v635
        %868 = vmatpush1.bf16.msra.mxu0 %v634
        %869 = vmatprep.subr.bf16.mxu0 %v639
        %870 = vmatpush1.bf16.msra.mxu0 %v638
        %871 = vmatprep.subr.bf16.mxu0 %v643
        %872 = vmatpush1.bf16.msra.mxu0 %v642
        %873 = vmatprep.subr.bf16.mxu0 %v647
        %874 = vmatpush1.bf16.msra.mxu0 %v646
        %875 = vmatprep.subr.bf16.mxu0 %v651
        %876 = vmatpush1.bf16.msra.mxu0 %v650
        %877 = vmatprep.subr.bf16.mxu0 %v655
        %878 = vmatpush1.bf16.msra.mxu0 %v654
        %879 = vmatprep.subr.bf16.mxu0 %v659
        %880 = vmatpush1.bf16.msra.mxu0 %v658
        %881 = vmatprep.subr.bf16.mxu0 %v663
        %882 = vmatpush1.bf16.msra.mxu0 %v662
        %883 = vmatprep.subr.bf16.mxu0 %v667
        %884 = vmatpush1.bf16.msra.mxu0 %v666
        %885 = vmatprep.subr.bf16.mxu0 %v671
        %886 = vmatpush1.bf16.msra.mxu0 %v670
        %887 = vmatprep.mubr.bf16.mxu0 %v280
        %888 = vmatmul.mubr.bf16.gmra.mrb[0].mxu0 %v279
        %v889 = vpop.f32.mrb[0].mxu0
        %v890 = vadd.f32 %v371, %v889
        %v891 = vpop.f32.mrb[0].mxu0
        %v892 = vadd.f32 %v375, %v891
        %v893 = vpop.f32.mrb[0].mxu0
        %v894 = vpop.f32.mrb[0].mxu0
        %895 = vdwg.mxu0
        %896 = vmatprep.subr.bf16.mxu0 %v675
        %897 = vmatpush1.bf16.msra.mxu0 %v674
        %898 = vmatprep.subr.bf16.mxu0 %v679
        %899 = vmatpush1.bf16.msra.mxu0 %v678
        %900 = vmatprep.subr.bf16.mxu0 %v771
        %901 = vmatpush1.bf16.msra.mxu0 %v768
        %902 = vmatprep.subr.bf16.mxu0 0
        %903 = vmatpush1.bf16.msra.mxu0 0
        %904 = vmatprep.subr.bf16.mxu0 0
        %905 = vmatpush1.bf16.msra.mxu0 0
        %906 = vmatprep.subr.bf16.mxu0 0
        %907 = vmatpush1.bf16.msra.mxu0 0
        %908 = vmatprep.subr.bf16.mxu0 0
        %909 = vmatpush1.bf16.msra.mxu0 0
        %910 = vmatprep.subr.bf16.mxu0 0
        %911 = vmatpush1.bf16.msra.mxu0 0
        %912 = vmatprep.subr.bf16.mxu0 0
        %913 = vmatpush1.bf16.msra.mxu0 0
        %914 = vmatprep.subr.bf16.mxu0 0
        %915 = vmatpush1.bf16.msra.mxu0 0
        %916 = vmatprep.subr.bf16.mxu0 0
        %917 = vmatpush1.bf16.msra.mxu0 0
        %918 = vmatprep.subr.bf16.mxu0 0
        %919 = vmatpush1.bf16.msra.mxu0 0
        %920 = vmatprep.subr.bf16.mxu0 0
        %921 = vmatpush1.bf16.msra.mxu0 0
        %922 = vmatprep.subr.bf16.mxu0 0
        %923 = vmatpush1.bf16.msra.mxu0 0
        %924 = vmatprep.subr.bf16.mxu0 0
        %925 = vmatpush1.bf16.msra.mxu0 0
        %926 = vmatprep.subr.bf16.mxu0 0
        %927 = vmatpush1.bf16.msra.mxu0 0
        %928 = vmatprep.mubr.bf16.mxu0 0
        %929 = vmatmul.mubr.bf16.gmra.mrb[0].mxu0 %v758
        %v930 = vpop.f32.mrb[0].mxu0
        %v931 = vadd.f32 %v890, %v930
        %v932 = vpop.f32.mrb[0].mxu0
        %v933 = vadd.f32 %v892, %v932
        %v934 = vpop.f32.mrb[0].mxu0
        %v935 = vpop.f32.mrb[0].mxu0
        %936 = vdwg.mxu0
        %s937 = sld [smem:[#allocation3]]
        %vm938 = vcmp.ge.f32.partialorder %v849, 0.0
        %vm939 = vcmp.ge.f32.partialorder %v851, 0.0
        %vm940 = vcmp.ge.f32.partialorder %v931, 0.0
        %vm941 = vcmp.ge.f32.partialorder %v933, 0.0
        %v942 = vstv %s937
        %v943 = vmul.f32 %v942, %v849
        %v944 = vmul.f32 %v942, %v851
        %v945 = vmul.f32 %v942, %v931
        %v946 = vmul.f32 %v942, %v933
        %v947 = vsel %vm938, %v849, %v943
        %v948 = vsel %vm939, %v851, %v944
        %v949 = vsel %vm940, %v931, %v945
        %v950 = vsel %vm941, %v933, %v946
        %v951 = vpack.c.bf16 %v947, %v947
        %v952 = vpack.c.bf16 %v948, %v948
        %v953 = vpack.c.bf16 %v949, %v949
        %v954 = vpack.c.bf16 %v950, %v950
        %v955 = vld [vmem:[#allocation9] sm:$0xff]
        %v956 = vld [vmem:[#allocation9 + $0x8] sm:$0xff]
        %v957 = vld [vmem:[#allocation9 + $0x10] sm:$0xff]
        %v958 = vld [vmem:[#allocation9 + $0x18] sm:$0xff]
        %v959 = vld [vmem:[#allocation9 + $0x20] sm:$0xff]
        %v960 = vld [vmem:[#allocation9 + $0x28] sm:$0xff]
        %v961 = vld [vmem:[#allocation9 + $0x30] sm:$0xff]
        %v962 = vld [vmem:[#allocation9 + $0x38] sm:$0xff]
        %v963 = vld [vmem:[#allocation9 + $0x40] sm:$0xff]
        %v964 = vld [vmem:[#allocation9 + $0x48] sm:$0xff]
        %v965 = vld [vmem:[#allocation9 + $0x50] sm:$0xff]
        %v966 = vld [vmem:[#allocation9 + $0x58] sm:$0xff]
        %v967 = vld [vmem:[#allocation9 + $0x60] sm:$0xff]
        %v968 = vld [vmem:[#allocation9 + $0x68] sm:$0xff]
        %v969 = vld [vmem:[#allocation9 + $0x70] sm:$0xff]
        %v970 = vld [vmem:[#allocation9 + $0x78] sm:$0xff]
        %v971 = vld [vmem:[#allocation9 + $0x80] sm:$0xff]
        %v972 = vld [vmem:[#allocation9 + $0x88] sm:$0xff]
        %v973 = vld [vmem:[#allocation9 + $0x90] sm:$0xff]
        %v974 = vld [vmem:[#allocation9 + $0x98] sm:$0xff]
        %v975 = vld [vmem:[#allocation9 + $0xa0] sm:$0xff]
        %v976 = vld [vmem:[#allocation9 + $0xa8] sm:$0xff]
        %v977 = vld [vmem:[#allocation9 + $0xb0] sm:$0xff]
        %v978 = vld [vmem:[#allocation9 + $0xb8] sm:$0xff]
        %v979 = vld [vmem:[#allocation9 + $0xc0] sm:$0xff]
        %v980 = vld [vmem:[#allocation9 + $0xc8] sm:$0xff]
        %v981 = vld [vmem:[#allocation9 + $0xd0] sm:$0xff]
        %v982 = vld [vmem:[#allocation9 + $0xd8] sm:$0xff]
        %v983 = vld [vmem:[#allocation9 + $0xe0] sm:$0xff]
        %v984 = vld [vmem:[#allocation9 + $0xe8] sm:$0xff]
        %v985 = vld [vmem:[#allocation9 + $0xf0] sm:$0xff]
        %v986 = vld [vmem:[#allocation9 + $0xf8] sm:$0xff]
        %v987 = vld [vmem:[#allocation9 + $0x100] sm:$0xff]
        %v988 = vld [vmem:[#allocation9 + $0x108] sm:$0xff]
        %v989 = vld [vmem:[#allocation9 + $0x110] sm:$0xff]
        %v990 = vld [vmem:[#allocation9 + $0x118] sm:$0xff]
        %v991 = vld [vmem:[#allocation9 + $0x120] sm:$0xff]
        %v992 = vld [vmem:[#allocation9 + $0x128] sm:$0xff]
        %v993 = vld [vmem:[#allocation9 + $0x130] sm:$0xff]
        %v994 = vld [vmem:[#allocation9 + $0x138] sm:$0xff]
        %v995 = vld [vmem:[#allocation9 + $0x140] sm:$0xff]
        %v996 = vld [vmem:[#allocation9 + $0x148] sm:$0xff]
        %v997 = vld [vmem:[#allocation9 + $0x150] sm:$0xff]
        %v998 = vld [vmem:[#allocation9 + $0x158] sm:$0xff]
        %v999 = vld [vmem:[#allocation9 + $0x160] sm:$0xff]
        %v1000 = vld [vmem:[#allocation9 + $0x168] sm:$0xff]
        %v1001 = vld [vmem:[#allocation9 + $0x170] sm:$0xff]
        %v1002 = vld [vmem:[#allocation9 + $0x178] sm:$0xff]
        %v1003 = vld [vmem:[#allocation9 + $0x180] sm:$0xff]
        %v1004 = vld [vmem:[#allocation9 + $0x188] sm:$0xff]
        %v1005 = vld [vmem:[#allocation9 + $0x190] sm:$0xff]
        %v1006 = vld [vmem:[#allocation9 + $0x198] sm:$0xff]
        %v1007 = vld [vmem:[#allocation9 + $0x1a0] sm:$0xff]
        %v1008 = vld [vmem:[#allocation9 + $0x1a8] sm:$0xff]
        %v1009 = vld [vmem:[#allocation9 + $0x1b0] sm:$0xff]
        %v1010 = vld [vmem:[#allocation9 + $0x1b8] sm:$0xff]
        %v1011 = vld [vmem:[#allocation9 + $0x1c0] sm:$0xff]
        %v1012 = vld [vmem:[#allocation9 + $0x1c8] sm:$0xff]
        %v1013 = vld [vmem:[#allocation9 + $0x1d0] sm:$0xff]
        %v1014 = vld [vmem:[#allocation9 + $0x1d8] sm:$0xff]
        %v1015 = vld [vmem:[#allocation9 + $0x1e0] sm:$0xff]
        %v1016 = vld [vmem:[#allocation9 + $0x1e8] sm:$0xff]
        %v1017 = vld [vmem:[#allocation9 + $0x1f0] sm:$0xff]
        %v1018 = vld [vmem:[#allocation9 + $0x1f8] sm:$0xff]
        %v1019 = vld [vmem:[%s5] sm:$0x3]
        %v1021 = vlaneseq
        %v1022 = vshrl.u32 %v1021, 7
        %v1023 = vsub.s32 0, %v1022
        %v1024 = vrot.slane %v1019, %v1023
        %v1025 = vlaneseq
        %v1026 = vshrl.u32 %v1025, 7
        %v1027 = vsub.s32 1, %v1026
        %v1028 = vrot.slane %v1019, %v1027
        %v1095 = vunpack.c.l.b16 %v955
        %v1096 = vunpack.c.h.b16 %v955
        %v1097 = vunpack.c.l.b16 %v956
        %v1098 = vunpack.c.h.b16 %v956
        %v1099 = vunpack.c.l.b16 %v957
        %v1100 = vunpack.c.h.b16 %v957
        %v1101 = vunpack.c.l.b16 %v958
        %v1102 = vunpack.c.h.b16 %v958
        %v1103 = vunpack.c.l.b16 %v959
        %v1104 = vunpack.c.h.b16 %v959
        %v1105 = vunpack.c.l.b16 %v960
        %v1106 = vunpack.c.h.b16 %v960
        %v1107 = vunpack.c.l.b16 %v961
        %v1108 = vunpack.c.h.b16 %v961
        %v1109 = vunpack.c.l.b16 %v962
        %v1110 = vunpack.c.h.b16 %v962
        %v1111 = vunpack.c.l.b16 %v963
        %v1112 = vunpack.c.h.b16 %v963
        %v1113 = vunpack.c.l.b16 %v964
        %v1114 = vunpack.c.h.b16 %v964
        %v1115 = vunpack.c.l.b16 %v965
        %v1116 = vunpack.c.h.b16 %v965
        %v1117 = vunpack.c.l.b16 %v966
        %v1118 = vunpack.c.h.b16 %v966
        %v1119 = vunpack.c.l.b16 %v967
        %v1120 = vunpack.c.h.b16 %v967
        %v1121 = vunpack.c.l.b16 %v968
        %v1122 = vunpack.c.h.b16 %v968
        %v1123 = vunpack.c.l.b16 %v969
        %v1124 = vunpack.c.h.b16 %v969
        %v1125 = vunpack.c.l.b16 %v970
        %v1126 = vunpack.c.h.b16 %v970
        %v1127 = vunpack.c.l.b16 %v971
        %v1128 = vunpack.c.h.b16 %v971
        %v1129 = vunpack.c.l.b16 %v972
        %v1130 = vunpack.c.h.b16 %v972
        %v1131 = vunpack.c.l.b16 %v973
        %v1132 = vunpack.c.h.b16 %v973
        %v1133 = vunpack.c.l.b16 %v974
        %v1134 = vunpack.c.h.b16 %v974
        %v1135 = vunpack.c.l.b16 %v975
        %v1136 = vunpack.c.h.b16 %v975
        %v1137 = vunpack.c.l.b16 %v976
        %v1138 = vunpack.c.h.b16 %v976
        %v1139 = vunpack.c.l.b16 %v977
        %v1140 = vunpack.c.h.b16 %v977
        %v1141 = vunpack.c.l.b16 %v978
        %v1142 = vunpack.c.h.b16 %v978
        %v1143 = vunpack.c.l.b16 %v979
        %v1144 = vunpack.c.h.b16 %v979
        %v1145 = vunpack.c.l.b16 %v980
        %v1146 = vunpack.c.h.b16 %v980
        %v1147 = vunpack.c.l.b16 %v981
        %v1148 = vunpack.c.h.b16 %v981
        %v1149 = vunpack.c.l.b16 %v982
        %v1150 = vunpack.c.h.b16 %v982
        %v1151 = vunpack.c.l.b16 %v983
        %v1152 = vunpack.c.h.b16 %v983
        %v1153 = vunpack.c.l.b16 %v984
        %v1154 = vunpack.c.h.b16 %v984
        %v1155 = vunpack.c.l.b16 %v985
        %v1156 = vunpack.c.h.b16 %v985
        %v1157 = vunpack.c.l.b16 %v986
        %v1158 = vunpack.c.h.b16 %v986
        %v1159 = vunpack.c.l.b16 %v987
        %v1160 = vunpack.c.h.b16 %v987
        %v1161 = vunpack.c.l.b16 %v988
        %v1162 = vunpack.c.h.b16 %v988
        %v1163 = vunpack.c.l.b16 %v989
        %v1164 = vunpack.c.h.b16 %v989
        %v1165 = vunpack.c.l.b16 %v990
        %v1166 = vunpack.c.h.b16 %v990
        %v1167 = vunpack.c.l.b16 %v991
        %v1168 = vunpack.c.h.b16 %v991
        %v1169 = vunpack.c.l.b16 %v992
        %v1170 = vunpack.c.h.b16 %v992
        %v1171 = vunpack.c.l.b16 %v993
        %v1172 = vunpack.c.h.b16 %v993
        %v1173 = vunpack.c.l.b16 %v994
        %v1174 = vunpack.c.h.b16 %v994
        %v1175 = vunpack.c.l.b16 %v995
        %v1176 = vunpack.c.h.b16 %v995
        %v1177 = vunpack.c.l.b16 %v996
        %v1178 = vunpack.c.h.b16 %v996
        %v1179 = vunpack.c.l.b16 %v997
        %v1180 = vunpack.c.h.b16 %v997
        %v1181 = vunpack.c.l.b16 %v998
        %v1182 = vunpack.c.h.b16 %v998
        %v1183 = vunpack.c.l.b16 %v999
        %v1184 = vunpack.c.h.b16 %v999
        %v1185 = vunpack.c.l.b16 %v1000
        %v1186 = vunpack.c.h.b16 %v1000
        %v1187 = vunpack.c.l.b16 %v1001
        %v1188 = vunpack.c.h.b16 %v1001
        %v1189 = vunpack.c.l.b16 %v1002
        %v1190 = vunpack.c.h.b16 %v1002
        %v1191 = vunpack.c.l.b16 %v1003
        %v1192 = vunpack.c.h.b16 %v1003
        %v1193 = vunpack.c.l.b16 %v1004
        %v1194 = vunpack.c.h.b16 %v1004
        %v1195 = vunpack.c.l.b16 %v1005
        %v1196 = vunpack.c.h.b16 %v1005
        %v1197 = vunpack.c.l.b16 %v1006
        %v1198 = vunpack.c.h.b16 %v1006
        %v1199 = vunpack.c.l.b16 %v1007
        %v1200 = vunpack.c.h.b16 %v1007
        %v1201 = vunpack.c.l.b16 %v1008
        %v1202 = vunpack.c.h.b16 %v1008
        %v1203 = vunpack.c.l.b16 %v1009
        %v1204 = vunpack.c.h.b16 %v1009
        %v1205 = vunpack.c.l.b16 %v1010
        %v1206 = vunpack.c.h.b16 %v1010
        %v1207 = vunpack.c.l.b16 %v1011
        %v1208 = vunpack.c.h.b16 %v1011
        %v1209 = vunpack.c.l.b16 %v1012
        %v1210 = vunpack.c.h.b16 %v1012
        %v1211 = vunpack.c.l.b16 %v1013
        %v1212 = vunpack.c.h.b16 %v1013
        %v1213 = vunpack.c.l.b16 %v1014
        %v1214 = vunpack.c.h.b16 %v1014
        %v1215 = vunpack.c.l.b16 %v1015
        %v1216 = vunpack.c.h.b16 %v1015
        %v1217 = vunpack.c.l.b16 %v1016
        %v1218 = vunpack.c.h.b16 %v1016
        %v1219 = vunpack.c.l.b16 %v1017
        %v1220 = vunpack.c.h.b16 %v1017
        %v1221 = vunpack.c.l.b16 %v1018
        %v1222 = vunpack.c.h.b16 %v1018
        %v1223 = vpack.c.b16 %v1097, %v1095
        %v1224 = vpack.c.b16 %v1098, %v1096
        %v1225 = vpack.c.b16 %v1101, %v1099
        %v1226 = vpack.c.b16 %v1102, %v1100
        %v1227 = vpack.c.b16 %v1105, %v1103
        %v1228 = vpack.c.b16 %v1106, %v1104
        %v1229 = vpack.c.b16 %v1109, %v1107
        %v1230 = vpack.c.b16 %v1110, %v1108
        %v1231 = vpack.c.b16 %v1113, %v1111
        %v1232 = vpack.c.b16 %v1114, %v1112
        %v1233 = vpack.c.b16 %v1117, %v1115
        %v1234 = vpack.c.b16 %v1118, %v1116
        %v1235 = vpack.c.b16 %v1121, %v1119
        %v1236 = vpack.c.b16 %v1122, %v1120
        %v1237 = vpack.c.b16 %v1125, %v1123
        %v1238 = vpack.c.b16 %v1126, %v1124
        %v1239 = vpack.c.b16 %v1129, %v1127
        %v1240 = vpack.c.b16 %v1130, %v1128
        %v1241 = vpack.c.b16 %v1133, %v1131
        %v1242 = vpack.c.b16 %v1134, %v1132
        %v1243 = vpack.c.b16 %v1137, %v1135
        %v1244 = vpack.c.b16 %v1138, %v1136
        %v1245 = vpack.c.b16 %v1141, %v1139
        %v1246 = vpack.c.b16 %v1142, %v1140
        %v1247 = vpack.c.b16 %v1145, %v1143
        %v1248 = vpack.c.b16 %v1146, %v1144
        %v1249 = vpack.c.b16 %v1149, %v1147
        %v1250 = vpack.c.b16 %v1150, %v1148
        %v1251 = vpack.c.b16 %v1153, %v1151
        %v1252 = vpack.c.b16 %v1154, %v1152
        %v1253 = vpack.c.b16 %v1157, %v1155
        %v1254 = vpack.c.b16 %v1158, %v1156
        %v1255 = vpack.c.b16 %v1161, %v1159
        %v1256 = vpack.c.b16 %v1162, %v1160
        %v1257 = vpack.c.b16 %v1165, %v1163
        %v1258 = vpack.c.b16 %v1166, %v1164
        %v1259 = vpack.c.b16 %v1169, %v1167
        %v1260 = vpack.c.b16 %v1170, %v1168
        %v1261 = vpack.c.b16 %v1173, %v1171
        %v1262 = vpack.c.b16 %v1174, %v1172
        %v1263 = vpack.c.b16 %v1177, %v1175
        %v1264 = vpack.c.b16 %v1178, %v1176
        %v1265 = vpack.c.b16 %v1181, %v1179
        %v1266 = vpack.c.b16 %v1182, %v1180
        %v1267 = vpack.c.b16 %v1185, %v1183
        %v1268 = vpack.c.b16 %v1186, %v1184
        %v1269 = vpack.c.b16 %v1189, %v1187
        %v1270 = vpack.c.b16 %v1190, %v1188
        %v1271 = vpack.c.b16 %v1193, %v1191
        %v1272 = vpack.c.b16 %v1194, %v1192
        %v1273 = vpack.c.b16 %v1197, %v1195
        %v1274 = vpack.c.b16 %v1198, %v1196
        %v1275 = vpack.c.b16 %v1201, %v1199
        %v1276 = vpack.c.b16 %v1202, %v1200
        %v1277 = vpack.c.b16 %v1205, %v1203
        %v1278 = vpack.c.b16 %v1206, %v1204
        %v1279 = vpack.c.b16 %v1209, %v1207
        %v1280 = vpack.c.b16 %v1210, %v1208
        %v1281 = vpack.c.b16 %v1213, %v1211
        %v1282 = vpack.c.b16 %v1214, %v1212
        %v1283 = vpack.c.b16 %v1217, %v1215
        %v1284 = vpack.c.b16 %v1218, %v1216
        %v1285 = vpack.c.b16 %v1221, %v1219
        %v1286 = vpack.c.b16 %v1222, %v1220
        %1351 = vmatprep.subr.bf16.mxu0 %v1224
        %1352 = vmatpush1.bf16.msra.mxu0 %v1223
        %1353 = vmatprep.subr.bf16.mxu0 %v1226
        %1354 = vmatpush1.bf16.msra.mxu0 %v1225
        %1355 = vmatprep.subr.bf16.mxu0 %v1228
        %1356 = vmatpush1.bf16.msra.mxu0 %v1227
        %1357 = vmatprep.subr.bf16.mxu0 %v1230
        %1358 = vmatpush1.bf16.msra.mxu0 %v1229
        %1359 = vmatprep.subr.bf16.mxu0 %v1232
        %1360 = vmatpush1.bf16.msra.mxu0 %v1231
        %1361 = vmatprep.subr.bf16.mxu0 %v1234
        %1362 = vmatpush1.bf16.msra.mxu0 %v1233
        %1363 = vmatprep.subr.bf16.mxu0 %v1236
        %1364 = vmatpush1.bf16.msra.mxu0 %v1235
        %1365 = vmatprep.subr.bf16.mxu0 %v1238
        %1366 = vmatpush1.bf16.msra.mxu0 %v1237
        %1367 = vmatprep.subr.bf16.mxu0 %v1240
        %1368 = vmatpush1.bf16.msra.mxu0 %v1239
        %1369 = vmatprep.subr.bf16.mxu0 %v1242
        %1370 = vmatpush1.bf16.msra.mxu0 %v1241
        %1371 = vmatprep.subr.bf16.mxu0 %v1244
        %1372 = vmatpush1.bf16.msra.mxu0 %v1243
        %1373 = vmatprep.subr.bf16.mxu0 %v1246
        %1374 = vmatpush1.bf16.msra.mxu0 %v1245
        %1375 = vmatprep.subr.bf16.mxu0 %v1248
        %1376 = vmatpush1.bf16.msra.mxu0 %v1247
        %1377 = vmatprep.subr.bf16.mxu0 %v1250
        %1378 = vmatpush1.bf16.msra.mxu0 %v1249
        %1379 = vmatprep.subr.bf16.mxu0 %v1252
        %1380 = vmatpush1.bf16.msra.mxu0 %v1251
        %1381 = vmatprep.subr.bf16.mxu0 %v1254
        %1382 = vmatpush1.bf16.msra.mxu0 %v1253
        %1383 = vmatprep.mubr.bf16.mxu0 %v952
        %1384 = vmatmul.mubr.bf16.gmra.mrb[0].mxu0 %v951
        %v1385 = vpop.f32.mrb[0].mxu0
        %v1386 = vadd.f32 %v1024, %v1385
        %v1387 = vpop.f32.mrb[0].mxu0
        %v1388 = vadd.f32 %v1028, %v1387
        %v1389 = vpop.f32.mrb[0].mxu0
        %v1390 = vpop.f32.mrb[0].mxu0
        %1391 = vdwg.mxu0
        %1392 = vmatprep.subr.bf16.mxu0 %v1256
        %1393 = vmatpush1.bf16.msra.mxu0 %v1255
        %1394 = vmatprep.subr.bf16.mxu0 %v1258
        %1395 = vmatpush1.bf16.msra.mxu0 %v1257
        %1396 = vmatprep.subr.bf16.mxu0 %v1260
        %1397 = vmatpush1.bf16.msra.mxu0 %v1259
        %1398 = vmatprep.subr.bf16.mxu0 %v1262
        %1399 = vmatpush1.bf16.msra.mxu0 %v1261
        %1400 = vmatprep.subr.bf16.mxu0 %v1264
        %1401 = vmatpush1.bf16.msra.mxu0 %v1263
        %1402 = vmatprep.subr.bf16.mxu0 %v1266
        %1403 = vmatpush1.bf16.msra.mxu0 %v1265
        %1404 = vmatprep.subr.bf16.mxu0 %v1268
        %1405 = vmatpush1.bf16.msra.mxu0 %v1267
        %1406 = vmatprep.subr.bf16.mxu0 %v1270
        %1407 = vmatpush1.bf16.msra.mxu0 %v1269
        %1408 = vmatprep.subr.bf16.mxu0 %v1272
        %1409 = vmatpush1.bf16.msra.mxu0 %v1271
        %1410 = vmatprep.subr.bf16.mxu0 %v1274
        %1411 = vmatpush1.bf16.msra.mxu0 %v1273
        %1412 = vmatprep.subr.bf16.mxu0 %v1276
        %1413 = vmatpush1.bf16.msra.mxu0 %v1275
        %1414 = vmatprep.subr.bf16.mxu0 %v1278
        %1415 = vmatpush1.bf16.msra.mxu0 %v1277
        %1416 = vmatprep.subr.bf16.mxu0 %v1280
        %1417 = vmatpush1.bf16.msra.mxu0 %v1279
        %1418 = vmatprep.subr.bf16.mxu0 %v1282
        %1419 = vmatpush1.bf16.msra.mxu0 %v1281
        %1420 = vmatprep.subr.bf16.mxu0 %v1284
        %1421 = vmatpush1.bf16.msra.mxu0 %v1283
        %1422 = vmatprep.subr.bf16.mxu0 %v1286
        %1423 = vmatpush1.bf16.msra.mxu0 %v1285
        %1424 = vmatprep.mubr.bf16.mxu0 %v954
        %1425 = vmatmul.mubr.bf16.gmra.mrb[0].mxu0 %v953
        %v1426 = vpop.f32.mrb[0].mxu0
        %v1427 = vadd.f32 %v1386, %v1426
        %v1428 = vpop.f32.mrb[0].mxu0
        %v1429 = vadd.f32 %v1388, %v1428
        %v1430 = vpop.f32.mrb[0].mxu0
        %v1431 = vpop.f32.mrb[0].mxu0
        %1432 = vdwg.mxu0
        %v1433 = vmul.f32 %v1427, %v1427
        %v1434 = vmul.f32 %v1429, %v1429
        %v1435 = vadd.f32 %v1433, %v1434
        %1436 = vadd.xlane.f32.xlu0 %v1435
        %v1437 = vpop.xlane.xlu0 %1436
        %v1438 = vmax.f32 %v1437, 1e-24
        %v1439 = vrsqrt.pop %v1438
        %v1440 = vmul.f32 %v1427, %v1439
        %v1441 = vmul.f32 %v1429, %v1439
        %1442 = vst [vmem:[%s271] sm:$0xff] %v1440
        %1443 = vst [vmem:[%s271 + $0x8] sm:$0xff] %v1441
        %s1444 = sand.u32 %s143, 1
        %s1445 = scalar_lea.sflag [#allocation6], %s1444
        %s1446 = sand.u32 %s143, 1
        %s1447 = smul.addr %s1446, 16
        %s1448 = scalar_lea.vmem [#allocation10], %s1447
        // Predicated region
        $region53: #{embedding_net_text.1} parent=39 // pred_check
          %p1449 = pneg %p153
        $region54: #{embedding_net_text.1} parent=39 // pred_check_branch
          %1451 = sbr.rel (%p1449) target = $region56
        $region55: #{embedding_net_text.1} parent=39 // pred_region
          %s1453 = ssub.s32 256, 256
          %1454 = vsyncadd %s1445, %s1453
          %s1455 = smul.addr %s25, 2
          %s1456 = smul.addr %s1455, 128
          %s1457 = scalar_lea.hbm %s6, %s1456
          %s1459 = sshll.u32 %s1448, 4
          %s1460 = int_to_ptr.vmem [resolvable:$true] %s1459
          %1462 = dma.vmem_to_hbm [thread:$0]  %s1460, 256, %s1457, %s1445
        $region56: #{embedding_net_text.1} parent=39 // pred_fallthru
          _
      $region40: #{embedding_net_text.1} parent=5 // pred_fallthru
        _
      %p1463 = scmp.le.s32.totalorder 2, %s20
      // Predicated region
      $region57: #{embedding_net_text.1} parent=5 // pred_check
        %p1464 = pneg %p1463
      $region58: #{embedding_net_text.1} parent=5 // pred_check_branch
        %1466 = sbr.rel (%p1464) target = $region60
      $region59: #{embedding_net_text.1} parent=5 // pred_region
        %s1467 = ssub.s32 %s20, 2
        // Predicated region
        $region61: #{embedding_net_text.1} parent=59 // pred_check
          %p1468 = pneg %p159
        $region62: #{embedding_net_text.1} parent=59 // pred_check_branch
          %1470 = sbr.rel (%p1468) target = $region64
        $region63: #{embedding_net_text.1} parent=59 // pred_region
          %s1471 = sand.u32 %s144, 1
          %s1472 = scalar_lea.sflag [#allocation6], %s1471
          %s1473 = sand.u32 %s144, 1
          %s1474 = smul.addr %s1473, 16
          %s1475 = scalar_lea.vmem [#allocation10], %s1474
          %1476 = dma.done %s1472, 256
        $region64: #{embedding_net_text.1} parent=59 // pred_fallthru
          _
      $region60: #{embedding_net_text.1} parent=5 // pred_fallthru
        _
    $region6: #{embedding_net_text.1} parent=1 // loop_footer
      %s24 = sadd.s32 1, %s20
    $region7: #{embedding_net_text.1} parent=1 // loop_footer_branch
      %19 = sbr.rel target = $region3
    $region8: #{embedding_net_text.1} parent=1 // loop_exit
      _
    %1477 = vsyncpa [#allocation5], 1
    %s1478 = scalar_lea.sflag [#allocation5], 1
    %1479 = vsyncpa %s1478, 1
    %1480 = vsyncpa [#allocation8], 1
    %1481 = vsyncpa [#allocation6], 1
    %s1482 = scalar_lea.sflag [#allocation6], 1
    %1483 = vsyncpa %s1482, 1

</llo_original>
